<compile_context>
chip_gen: v7x
topology: tpu7x:2x2x1
jax: 0.10.0
libtpu: 0.0.40
codegen_flags: <defaults>
</compile_context>

<pallas_src>
import numpy as np
import jax
import jax.numpy as jnp
from jax import lax
from jax.experimental import pallas as pl
from jax.experimental.pallas import tpu as pltpu


# ----------------------------------------------------------------------------
# Deterministic parameter ("buffer") construction — mirrors PyTorch __init__,
# seeded so it is reproducible in-script. (Host-side numpy, not a kernel.)
# ----------------------------------------------------------------------------
BLOCK_SIZE = 16
MEASUREMENT_RATIO = 0.5
N = BLOCK_SIZE ** 2                              # 256 (flattened block)
M = int(BLOCK_SIZE ** 2 * MEASUREMENT_RATIO)     # 128 (measurement dim)


def generate_logistic_chaotic_sequence(length=256, r=3.99, seed=0):
    rng = np.random.default_rng(seed)
    x = rng.random()                             # deterministic initial condition
    sequence = []
    for _ in range(length):
        x = r * x * (1 - x)
        sequence.append(x)
    return np.array(sequence)


def generate_chaotic_toeplitz_matrix(sequence):
    c = sequence[:N]
    r = sequence[1:M + 1]
    toeplitz = np.zeros((M, N))
    for i in range(M):
        for j in range(N):
            k = i - j
            if k >= 0:
                toeplitz[i, j] = c[k % len(c)]
            else:
                toeplitz[i, j] = r[(-k) % len(r)]
    return toeplitz


def binarize_matrix(matrix):
    threshold = np.mean(matrix)
    return (matrix >= threshold).astype(np.float32)


def generate_01_chaotic_toeplitz():
    seq = generate_logistic_chaotic_sequence()
    toeplitz = generate_chaotic_toeplitz_matrix(seq)
    return binarize_matrix(toeplitz)             # (M, N) float32, {0,1}


# ----------------------------------------------------------------------------
# Pallas kernel: x_tile (TB, N) @ phi_t (N, M) -> (TB, M)
# phi_t is pre-transposed + bf16 in the wrapper (exact: phi is {0,1}).
# x is split exactly into 3 bf16 chunks (hi/mid/lo ~= 24 mantissa bits), so
# three bf16 MXU passes with f32 accumulation reproduce f32-matmul accuracy at
# half the MXU cost of precision=HIGHEST (6 passes).
# ----------------------------------------------------------------------------
def sampler_kernel(x_ref, phi_ref, o_ref):
    x = x_ref[...]                                   # (TB, N) f32
    phi = phi_ref[...]                               # (N, M)  bf16, exact {0,1}

    hi = x.astype(jnp.bfloat16)
    r1 = x - hi.astype(jnp.float32)                  # exact residual
    mid = r1.astype(jnp.bfloat16)
    lo = (r1 - mid.astype(jnp.float32)).astype(jnp.bfloat16)

    dn = (((1,), (0,)), ((), ()))                    # lhs-last x rhs-first (canonical)
    acc = lax.dot_general(hi, phi, dn, preferred_element_type=jnp.float32)
    acc = acc + lax.dot_general(mid, phi, dn, preferred_element_type=jnp.float32)
    acc = acc + lax.dot_general(lo, phi, dn, preferred_element_type=jnp.float32)
    o_ref[...] = acc.astype(o_ref.dtype)


def _round_up(a, b):
    return ((a + b - 1) // b) * b


def chaotic_toeplitz_sampler(x_nchw: jax.Array, phi: jax.Array, *,
                             max_tile: int = 2048,
                             small_batch_threshold: int = 64) -> jax.Array:
    """x_nchw: (B, 1, 16, 16) float32; phi: (M, N) float32 {0,1}. Returns (B, M)."""
    B = x_nchw.shape[0]
    x_flat = x_nchw.reshape(B, -1)                   # torch .view(B, -1)
    assert x_flat.shape[1] == N

    # Small-batch fast path: pallas_call launch/DMA machinery dominates for a
    # handful of rows; XLA's fused matmul is faster there.
    if B <= small_batch_threshold:
        return jnp.matmul(x_flat, phi.T, precision=lax.Precision.HIGHEST)

    # One-time layout prep: (N, M) bf16. Exact since phi is {0,1}.
    phi_t = phi.T.astype(jnp.bfloat16)               # (256, 128)

    # --- Tiling -------------------------------------------------------------
    # Pad only to a multiple of 8 (f32 sublane), then split into n_tiles so
    # per-tile padding is <= 7 rows (never round B up to a multiple of TB).
    B8 = _round_up(B, 8)
    n_tiles = pl.cdiv(B8, max_tile)
    # Keep >= 2 grid steps when there's enough work so v7x's two TensorCores
    # each stream their own tiles (parallel axis); no-op on v5e/v6e.
    if n_tiles == 1 and B8 >= 2048:
        n_tiles = 2
    TB = _round_up(pl.cdiv(B8, n_tiles), 8)
    B_pad = n_tiles * TB
    if B_pad != B:
        x_flat = jnp.pad(x_flat, ((0, B_pad - B), (0, 0)))

    cost = pl.CostEstimate(
        flops=2 * B_pad * N * M,
        transcendentals=0,
        bytes_accessed=4 * (B_pad * N + B_pad * M) + 2 * N * M,
    )

    out = pl.pallas_call(
        sampler_kernel,
        out_shape=jax.ShapeDtypeStruct((B_pad, M), jnp.float32),
        grid=(n_tiles,),
        in_specs=[
            pl.BlockSpec((TB, N), lambda i: (i, 0)),   # x tile, double-buffered
            pl.BlockSpec((N, M), lambda i: (0, 0)),    # phi_t: DMA'd once, resident
        ],
        out_specs=pl.BlockSpec((TB, M), lambda i: (i, 0)),
        compiler_params=pltpu.CompilerParams(
            dimension_semantics=("parallel",),         # megacore-shardable on v7x
            # TB=2048: ~6 MiB pipeline buffers + kernel temporaries; 32 MiB is
            # safe on v5e (128 MiB phys), v6e (128 MiB) and v7x (64 MiB/TC),
            # and lifts v5e's 16 MiB scoped default.
            vmem_limit_bytes=32 * 1024 * 1024,
        ),
        cost_estimate=cost,
    )(x_flat, phi_t)

    return out[:B]


# ----------------------------------------------------------------------------
# Main: deterministic inputs, run kernel, check against plain-JAX reference.
# ----------------------------------------------------------------------------
if __name__ == "__main__":
    key = jax.random.PRNGKey(0)
    B = 2
    x = jax.random.normal(key, (B, 1, BLOCK_SIZE, BLOCK_SIZE), dtype=jnp.float32)

    phi = jnp.asarray(generate_01_chaotic_toeplitz())   # (128, 256) {0,1} f32

    # small_batch_threshold=0 forces the Pallas path so the kernel itself is
    # exercised/validated even at this tiny demo batch.
    out = chaotic_toeplitz_sampler(x, phi, small_batch_threshold=0)
    out = jax.block_until_ready(out)

    # Reference (pure JAX) — same semantics as the torch forward.
    ref = jnp.matmul(x.reshape(B, -1), phi.T, precision=lax.Precision.HIGHEST)
    assert out.shape == (B, M), out.shape
    np.testing.assert_allclose(np.asarray(out), np.asarray(ref), rtol=1e-5, atol=1e-5)

    print("KERNEL_OK")
</pallas_src>

<mosaic_0001>
module attributes {stable_mosaic.version = 11 : i64} {
  func.func @sampler_kernel(%arg0: i32, %arg1: memref<8x256xf32, #tpu.memory_space<vmem>>, %arg2: memref<256x128xbf16, #tpu.memory_space<vmem>>, %arg3: memref<8x128xf32, #tpu.memory_space<vmem>>) attributes {dimension_semantics = [#tpu.dimension_semantics<parallel>], iteration_bounds = array<i64: 1>, scalar_prefetch = 0 : i64, scratch_operands = 0 : i64, tpu.core_type = #tpu.core_type<tc>, window_params = [{transform_indices = @transform_0, window_bounds = array<i64: 8, 256>}, {pipeline_mode = #tpu.pipeline_mode<synchronous>, transform_indices = @transform_1, window_bounds = array<i64: 256, 128>}, {transform_indices = @transform_2, window_bounds = array<i64: 8, 128>}]} {
    %c0 = arith.constant 0 : index
    %c0_0 = arith.constant 0 : index
    %0 = vector.load %arg1[%c0, %c0_0] : memref<8x256xf32, #tpu.memory_space<vmem>>, vector<8x256xf32>
    %c0_1 = arith.constant 0 : index
    %c0_2 = arith.constant 0 : index
    %1 = vector.load %arg2[%c0_1, %c0_2] : memref<256x128xbf16, #tpu.memory_space<vmem>>, vector<256x128xbf16>
    %2 = arith.truncf %0 : vector<8x256xf32> to vector<8x256xbf16>
    %3 = arith.extf %2 : vector<8x256xbf16> to vector<8x256xf32>
    %4 = arith.subf %0, %3 : vector<8x256xf32>
    %5 = arith.truncf %4 : vector<8x256xf32> to vector<8x256xbf16>
    %6 = arith.extf %5 : vector<8x256xbf16> to vector<8x256xf32>
    %7 = arith.subf %4, %6 : vector<8x256xf32>
    %8 = arith.truncf %7 : vector<8x256xf32> to vector<8x256xbf16>
    %cst = arith.constant dense<0.000000e+00> : vector<8x128xf32>
    %9 = tpu.matmul %2, %1, %cst {dimension_numbers = #tpu.dot_dimension_numbers<[1], [0], [0], [1], [0, 0, 1, 1], [], []>} : vector<8x256xbf16>, vector<256x128xbf16>, vector<8x128xf32> -> vector<8x128xf32>
    %cst_3 = arith.constant dense<0.000000e+00> : vector<8x128xf32>
    %10 = tpu.matmul %5, %1, %cst_3 {dimension_numbers = #tpu.dot_dimension_numbers<[1], [0], [0], [1], [0, 0, 1, 1], [], []>} : vector<8x256xbf16>, vector<256x128xbf16>, vector<8x128xf32> -> vector<8x128xf32>
    %11 = arith.addf %9, %10 : vector<8x128xf32>
    %cst_4 = arith.constant dense<0.000000e+00> : vector<8x128xf32>
    %12 = tpu.matmul %8, %1, %cst_4 {dimension_numbers = #tpu.dot_dimension_numbers<[1], [0], [0], [1], [0, 0, 1, 1], [], []>} : vector<8x256xbf16>, vector<256x128xbf16>, vector<8x128xf32> -> vector<8x128xf32>
    %13 = arith.addf %11, %12 : vector<8x128xf32>
    %c0_5 = arith.constant 0 : index
    %c0_6 = arith.constant 0 : index
    %14 = vector.load %arg3[%c0_5, %c0_6] : memref<8x128xf32, #tpu.memory_space<vmem>>, vector<8x128xf32>
    tpu.vector_store %arg3[%c0_5, %c0_6], %13 {strides = array<i32>} : memref<8x128xf32, #tpu.memory_space<vmem>>, vector<8x128xf32>,
    return
  }
  func.func @transform_0(%arg0: i32) -> (i32, i32) {
    %c0_i32 = arith.constant 0 : i32
    %c0_i32_0 = arith.constant 0 : i32
    return %arg0, %c0_i32 : i32, i32
  }
  func.func @transform_1(%arg0: i32) -> (i32, i32) {
    %c0_i32 = arith.constant 0 : i32
    %c0_i32_0 = arith.constant 0 : i32
    %c0_i32_1 = arith.constant 0 : i32
    return %c0_i32, %c0_i32_0 : i32, i32
  }
  func.func @transform_2(%arg0: i32) -> (i32, i32) {
    %c0_i32 = arith.constant 0 : i32
    %c0_i32_0 = arith.constant 0 : i32
    return %arg0, %c0_i32 : i32, i32
  }
}

</mosaic_0001>

<llo_original>
// kernel: tpu_custom_call.1
$region0: #{tpu_custom_call.1}
  #allocation0 [shape = 'u32[]', space=smem, size = 0x4, offset = 0x4, fixed_abs, tag = 'smem constant byte address 0x4 - core index']
  #allocation1 [shape = 'u32[144,128]{1,0:T(1,128)}', space=vmem, size = 0x12000, scoped, tag = 'internal scratch']
  %s0 = inlined_call_operand.hbm [shape: f32[8,256], index: 0, kind: input, shape index: {}]
  %s1 = inlined_call_operand.hbm [shape: bf16[256,128], index: 1, kind: input, shape index: {}]
  %s2 = inlined_call_operand.hbm [shape: f32[8,128], index: 2, kind: output, shape index: {}]
  %s3 = sld [smem:[#allocation0]]
  $region26: #{tpu_custom_call.1} parent=0
    _
  %s5 = ssub.s32 1, %s3
  %s6 = scalar_select 0, %s5, %s3
  $region1: #{tpu_custom_call.1} parent=0
    #allocation2 [shape = 'u8[8192]{0}', space=vmem, size = 0x2000, scoped, tag = 'input window, operand 0, single buffered']
    #allocation3 [shape = 's32[1]{0}', space=sflag, size = 0x4, scoped, tag = 'scoped memory for tpu_custom_call.1']
    #allocation4 [shape = 's32[1]{0}', space=sflag, size = 0x4, scoped, tag = 'scoped memory for tpu_custom_call.1']
    #allocation5 [shape = 'u8[65536]{0}', space=vmem, size = 0x10000, scoped, tag = 'input window, operand 1, single buffered']
    #allocation6 [shape = 's32[1]{0}', space=sflag, size = 0x4, scoped, tag = 'scoped memory for tpu_custom_call.1']
    #allocation7 [shape = 'u8[4096]{0}', space=vmem, size = 0x1000, scoped, tag = 'output window, operand 0, single buffered']
    %7 = vsyncpa [#allocation3], 0
    %8 = vsyncpa [#allocation6], 0
    %9 = vsyncpa [#allocation4], 0
    // Predicated region
    $region2: #{tpu_custom_call.1} parent=1 // pred_check
      _
    $region3: #{tpu_custom_call.1} parent=1 // pred_check_branch
      %11 = sbr.rel (0) target = $region5
    $region4: #{tpu_custom_call.1} parent=1 // pred_region
      %s13 = ssub.s32 256, 256
      %14 = vsyncadd [#allocation3], %s13
      %s16 = sshll.u32 [#allocation2], 4
      %s17 = int_to_ptr.vmem [resolvable:$true] %s16
      %19 = dma.hbm_to_vmem [thread:$0]  %s0, 256, %s17, [#allocation3]
    $region5: #{tpu_custom_call.1} parent=1 // pred_fallthru
      _
    // Predicated region
    $region6: #{tpu_custom_call.1} parent=1 // pred_check
      _
    $region7: #{tpu_custom_call.1} parent=1 // pred_check_branch
      %21 = sbr.rel (0) target = $region9
    $region8: #{tpu_custom_call.1} parent=1 // pred_region
      %s23 = ssub.s32 2048, 2048
      %24 = vsyncadd [#allocation6], %s23
      %s25 = sshll.u32 [#allocation5], 4
      %s26 = int_to_ptr.vmem [resolvable:$true] %s25
      %31 = dma.hbm_to_vmem [thread:$0]  %s1, 2048, %s26, [#allocation6], 64, 64, 4
    $region9: #{tpu_custom_call.1} parent=1 // pred_fallthru
      _
    // Predicated region
    $region10: #{tpu_custom_call.1} parent=1 // pred_check
      _
    $region11: #{tpu_custom_call.1} parent=1 // pred_check_branch
      %33 = sbr.rel (0) target = $region13
    $region12: #{tpu_custom_call.1} parent=1 // pred_region
      %34 = dma.done [#allocation3], 256
    $region13: #{tpu_custom_call.1} parent=1 // pred_fallthru
      _
    // Predicated region
    $region14: #{tpu_custom_call.1} parent=1 // pred_check
      _
    $region15: #{tpu_custom_call.1} parent=1 // pred_check_branch
      %36 = sbr.rel (0) target = $region17
    $region16: #{tpu_custom_call.1} parent=1 // pred_region
      %37 = dma.done [#allocation6], 2048
    $region17: #{tpu_custom_call.1} parent=1 // pred_fallthru
      _
    %v39 = vld [vmem:[#allocation2] sm:$0xff]
    %v40 = vld [vmem:[#allocation2 + $0x8] sm:$0xff]
    %v41 = vld [vmem:[#allocation5] sm:$0xf]
    %v42 = vld [vmem:[#allocation5 + $0x4] sm:$0xf]
    %v43 = vld [vmem:[#allocation5 + $0x8] sm:$0xf]
    %v44 = vld [vmem:[#allocation5 + $0xc] sm:$0xf]
    %v45 = vld [vmem:[#allocation5 + $0x10] sm:$0xf]
    %v46 = vld [vmem:[#allocation5 + $0x14] sm:$0xf]
    %v47 = vld [vmem:[#allocation5 + $0x18] sm:$0xf]
    %v48 = vld [vmem:[#allocation5 + $0x1c] sm:$0xf]
    %v49 = vld [vmem:[#allocation5 + $0x20] sm:$0xf]
    %v50 = vld [vmem:[#allocation5 + $0x24] sm:$0xf]
    %v51 = vld [vmem:[#allocation5 + $0x28] sm:$0xf]
    %v52 = vld [vmem:[#allocation5 + $0x2c] sm:$0xf]
    %v53 = vld [vmem:[#allocation5 + $0x30] sm:$0xf]
    %v54 = vld [vmem:[#allocation5 + $0x34] sm:$0xf]
    %v55 = vld [vmem:[#allocation5 + $0x38] sm:$0xf]
    %v56 = vld [vmem:[#allocation5 + $0x3c] sm:$0xf]
    %v57 = vld [vmem:[#allocation5 + $0x40] sm:$0xf]
    %v58 = vld [vmem:[#allocation5 + $0x44] sm:$0xf]
    %v59 = vld [vmem:[#allocation5 + $0x48] sm:$0xf]
    %v60 = vld [vmem:[#allocation5 + $0x4c] sm:$0xf]
    %v61 = vld [vmem:[#allocation5 + $0x50] sm:$0xf]
    %v62 = vld [vmem:[#allocation5 + $0x54] sm:$0xf]
    %v63 = vld [vmem:[#allocation5 + $0x58] sm:$0xf]
    %v64 = vld [vmem:[#allocation5 + $0x5c] sm:$0xf]
    %v65 = vld [vmem:[#allocation5 + $0x60] sm:$0xf]
    %v66 = vld [vmem:[#allocation5 + $0x64] sm:$0xf]
    %v67 = vld [vmem:[#allocation5 + $0x68] sm:$0xf]
    %v68 = vld [vmem:[#allocation5 + $0x6c] sm:$0xf]
    %v69 = vld [vmem:[#allocation5 + $0x70] sm:$0xf]
    %v70 = vld [vmem:[#allocation5 + $0x74] sm:$0xf]
    %v71 = vld [vmem:[#allocation5 + $0x78] sm:$0xf]
    %v72 = vld [vmem:[#allocation5 + $0x7c] sm:$0xf]
    %v73 = vpack.c.bf16 %v39, %v39
    %v74 = vpack.c.bf16 %v40, %v40
    %v75 = vunpack.c.l.bf16 %v73
    %v76 = vunpack.c.l.bf16 %v74
    %v77 = vsub.f32 %v39, %v75
    %v78 = vsub.f32 %v40, %v76
    %v79 = vpack.c.bf16 %v77, %v77
    %v80 = vpack.c.bf16 %v78, %v78
    %v81 = vunpack.c.l.bf16 %v79
    %v82 = vunpack.c.l.bf16 %v80
    %v83 = vsub.f32 %v77, %v81
    %v84 = vsub.f32 %v78, %v82
    %v85 = vpack.c.bf16 %v83, %v83
    %v86 = vpack.c.bf16 %v84, %v84
    %v119 = vunpack.c.l.b16 %v41
    %v120 = vunpack.c.l.b16 %v42
    %v121 = vunpack.c.l.b16 %v43
    %v122 = vunpack.c.l.b16 %v44
    %v123 = vunpack.c.l.b16 %v45
    %v124 = vunpack.c.l.b16 %v46
    %v125 = vunpack.c.l.b16 %v47
    %v126 = vunpack.c.l.b16 %v48
    %v127 = vunpack.c.l.b16 %v49
    %v128 = vunpack.c.l.b16 %v50
    %v129 = vunpack.c.l.b16 %v51
    %v130 = vunpack.c.l.b16 %v52
    %v131 = vunpack.c.l.b16 %v53
    %v132 = vunpack.c.l.b16 %v54
    %v133 = vunpack.c.l.b16 %v55
    %v134 = vunpack.c.l.b16 %v56
    %v135 = vunpack.c.l.b16 %v57
    %v136 = vunpack.c.l.b16 %v58
    %v137 = vunpack.c.l.b16 %v59
    %v138 = vunpack.c.l.b16 %v60
    %v139 = vunpack.c.l.b16 %v61
    %v140 = vunpack.c.l.b16 %v62
    %v141 = vunpack.c.l.b16 %v63
    %v142 = vunpack.c.l.b16 %v64
    %v143 = vunpack.c.l.b16 %v65
    %v144 = vunpack.c.l.b16 %v66
    %v145 = vunpack.c.l.b16 %v67
    %v146 = vunpack.c.l.b16 %v68
    %v147 = vunpack.c.l.b16 %v69
    %v148 = vunpack.c.l.b16 %v70
    %v149 = vunpack.c.l.b16 %v71
    %v150 = vunpack.c.l.b16 %v72
    %v151 = vpack.c.b16 %v120, %v119
    %v152 = vpack.c.b16 %v122, %v121
    %v153 = vpack.c.b16 %v124, %v123
    %v154 = vpack.c.b16 %v126, %v125
    %v155 = vpack.c.b16 %v128, %v127
    %v156 = vpack.c.b16 %v130, %v129
    %v157 = vpack.c.b16 %v132, %v131
    %v158 = vpack.c.b16 %v134, %v133
    %v159 = vpack.c.b16 %v136, %v135
    %v160 = vpack.c.b16 %v138, %v137
    %v161 = vpack.c.b16 %v140, %v139
    %v162 = vpack.c.b16 %v142, %v141
    %v163 = vpack.c.b16 %v144, %v143
    %v164 = vpack.c.b16 %v146, %v145
    %v165 = vpack.c.b16 %v148, %v147
    %v166 = vpack.c.b16 %v150, %v149
    %183 = vmatprep.subr.bf16.mxu0 0
    %184 = vmatpush1.bf16.msra.mxu0 %v151
    %185 = vmatprep.subr.bf16.mxu0 0
    %186 = vmatpush1.bf16.msra.mxu0 %v152
    %187 = vmatprep.subr.bf16.mxu0 0
    %188 = vmatpush1.bf16.msra.mxu0 %v153
    %189 = vmatprep.subr.bf16.mxu0 0
    %190 = vmatpush1.bf16.msra.mxu0 %v154
    %191 = vmatprep.subr.bf16.mxu0 0
    %192 = vmatpush1.bf16.msra.mxu0 %v155
    %193 = vmatprep.subr.bf16.mxu0 0
    %194 = vmatpush1.bf16.msra.mxu0 %v156
    %195 = vmatprep.subr.bf16.mxu0 0
    %196 = vmatpush1.bf16.msra.mxu0 %v157
    %197 = vmatprep.subr.bf16.mxu0 0
    %198 = vmatpush1.bf16.msra.mxu0 %v158
    %199 = vmatprep.subr.bf16.mxu0 0
    %200 = vmatpush1.bf16.msra.mxu0 %v159
    %201 = vmatprep.subr.bf16.mxu0 0
    %202 = vmatpush1.bf16.msra.mxu0 %v160
    %203 = vmatprep.subr.bf16.mxu0 0
    %204 = vmatpush1.bf16.msra.mxu0 %v161
    %205 = vmatprep.subr.bf16.mxu0 0
    %206 = vmatpush1.bf16.msra.mxu0 %v162
    %207 = vmatprep.subr.bf16.mxu0 0
    %208 = vmatpush1.bf16.msra.mxu0 %v163
    %209 = vmatprep.subr.bf16.mxu0 0
    %210 = vmatpush1.bf16.msra.mxu0 %v164
    %211 = vmatprep.subr.bf16.mxu0 0
    %212 = vmatpush1.bf16.msra.mxu0 %v165
    %213 = vmatprep.subr.bf16.mxu0 0
    %214 = vmatpush1.bf16.msra.mxu0 %v166
    %215 = vmatprep.mubr.bf16.mxu0 %v80
    %216 = vmatmul.mubr.bf16.gmra.mrb[0].mxu0 %v79
    %v217 = vpop.f32.mrb[0].mxu0
    %v218 = vadd.f32 0.0, %v217
    %v219 = vpop.f32.mrb[0].mxu0
    %v220 = vpop.f32.mrb[0].mxu0
    %v221 = vpop.f32.mrb[0].mxu0
    %222 = vdwg.mxu0
    %223 = vmatprep.subr.bf16.mxu0 0
    %224 = vmatpush1.bf16.msra.mxu0 %v151
    %225 = vmatprep.subr.bf16.mxu0 0
    %226 = vmatpush1.bf16.msra.mxu0 %v152
    %227 = vmatprep.subr.bf16.mxu0 0
    %228 = vmatpush1.bf16.msra.mxu0 %v153
    %229 = vmatprep.subr.bf16.mxu0 0
    %230 = vmatpush1.bf16.msra.mxu0 %v154
    %231 = vmatprep.subr.bf16.mxu0 0
    %232 = vmatpush1.bf16.msra.mxu0 %v155
    %233 = vmatprep.subr.bf16.mxu0 0
    %234 = vmatpush1.bf16.msra.mxu0 %v156
    %235 = vmatprep.subr.bf16.mxu0 0
    %236 = vmatpush1.bf16.msra.mxu0 %v157
    %237 = vmatprep.subr.bf16.mxu0 0
    %238 = vmatpush1.bf16.msra.mxu0 %v158
    %239 = vmatprep.subr.bf16.mxu0 0
    %240 = vmatpush1.bf16.msra.mxu0 %v159
    %241 = vmatprep.subr.bf16.mxu0 0
    %242 = vmatpush1.bf16.msra.mxu0 %v160
    %243 = vmatprep.subr.bf16.mxu0 0
    %244 = vmatpush1.bf16.msra.mxu0 %v161
    %245 = vmatprep.subr.bf16.mxu0 0
    %246 = vmatpush1.bf16.msra.mxu0 %v162
    %247 = vmatprep.subr.bf16.mxu0 0
    %248 = vmatpush1.bf16.msra.mxu0 %v163
    %249 = vmatprep.subr.bf16.mxu0 0
    %250 = vmatpush1.bf16.msra.mxu0 %v164
    %251 = vmatprep.subr.bf16.mxu0 0
    %252 = vmatpush1.bf16.msra.mxu0 %v165
    %253 = vmatprep.subr.bf16.mxu0 0
    %254 = vmatpush1.bf16.msra.mxu0 %v166
    %255 = vmatprep.mubr.bf16.mxu0 %v74
    %256 = vmatmul.mubr.bf16.gmra.mrb[0].mxu0 %v73
    %v257 = vpop.f32.mrb[0].mxu0
    %v258 = vadd.f32 %v218, %v257
    %v259 = vpop.f32.mrb[0].mxu0
    %v260 = vpop.f32.mrb[0].mxu0
    %v261 = vpop.f32.mrb[0].mxu0
    %262 = vdwg.mxu0
    %263 = vmatprep.subr.bf16.mxu0 0
    %264 = vmatpush1.bf16.msra.mxu0 %v151
    %265 = vmatprep.subr.bf16.mxu0 0
    %266 = vmatpush1.bf16.msra.mxu0 %v152
    %267 = vmatprep.subr.bf16.mxu0 0
    %268 = vmatpush1.bf16.msra.mxu0 %v153
    %269 = vmatprep.subr.bf16.mxu0 0
    %270 = vmatpush1.bf16.msra.mxu0 %v154
    %271 = vmatprep.subr.bf16.mxu0 0
    %272 = vmatpush1.bf16.msra.mxu0 %v155
    %273 = vmatprep.subr.bf16.mxu0 0
    %274 = vmatpush1.bf16.msra.mxu0 %v156
    %275 = vmatprep.subr.bf16.mxu0 0
    %276 = vmatpush1.bf16.msra.mxu0 %v157
    %277 = vmatprep.subr.bf16.mxu0 0
    %278 = vmatpush1.bf16.msra.mxu0 %v158
    %279 = vmatprep.subr.bf16.mxu0 0
    %280 = vmatpush1.bf16.msra.mxu0 %v159
    %281 = vmatprep.subr.bf16.mxu0 0
    %282 = vmatpush1.bf16.msra.mxu0 %v160
    %283 = vmatprep.subr.bf16.mxu0 0
    %284 = vmatpush1.bf16.msra.mxu0 %v161
    %285 = vmatprep.subr.bf16.mxu0 0
    %286 = vmatpush1.bf16.msra.mxu0 %v162
    %287 = vmatprep.subr.bf16.mxu0 0
    %288 = vmatpush1.bf16.msra.mxu0 %v163
    %289 = vmatprep.subr.bf16.mxu0 0
    %290 = vmatpush1.bf16.msra.mxu0 %v164
    %291 = vmatprep.subr.bf16.mxu0 0
    %292 = vmatpush1.bf16.msra.mxu0 %v165
    %293 = vmatprep.subr.bf16.mxu0 0
    %294 = vmatpush1.bf16.msra.mxu0 %v166
    %295 = vmatprep.mubr.bf16.mxu0 %v86
    %296 = vmatmul.mubr.bf16.gmra.mrb[0].mxu0 %v85
    %v297 = vpop.f32.mrb[0].mxu0
    %v298 = vadd.f32 0.0, %v297
    %v299 = vpop.f32.mrb[0].mxu0
    %v300 = vpop.f32.mrb[0].mxu0
    %v301 = vpop.f32.mrb[0].mxu0
    %302 = vdwg.mxu0
    %v303 = vadd.f32 %v258, %v298
    %304 = vst [vmem:[#allocation7] sm:$0xff] %v303
    // Predicated region
    $region18: #{tpu_custom_call.1} parent=1 // pred_check
      _
    $region19: #{tpu_custom_call.1} parent=1 // pred_check_branch
      %306 = sbr.rel (0) target = $region21
    $region20: #{tpu_custom_call.1} parent=1 // pred_region
      %s308 = ssub.s32 128, 128
      %309 = vsyncadd [#allocation4], %s308
      %s311 = sshll.u32 [#allocation7], 4
      %s312 = int_to_ptr.vmem [resolvable:$true] %s311
      %314 = dma.vmem_to_hbm [thread:$0]  %s312, 128, %s2, [#allocation4]
    $region21: #{tpu_custom_call.1} parent=1 // pred_fallthru
      _
    // Predicated region
    $region22: #{tpu_custom_call.1} parent=1 // pred_check
      _
    $region23: #{tpu_custom_call.1} parent=1 // pred_check_branch
      %316 = sbr.rel (0) target = $region25
    $region24: #{tpu_custom_call.1} parent=1 // pred_region
      %317 = dma.done [#allocation4], 128
    $region25: #{tpu_custom_call.1} parent=1 // pred_fallthru
      _
    %318 = vsyncpa [#allocation3], 1
    %319 = vsyncpa [#allocation6], 1
    %320 = vsyncpa [#allocation4], 1

</llo_original>
